<compile_context>
chip_gen: v5e
topology: v5e:2x2
jax: 0.10.0
libtpu: 0.0.40
codegen_flags: <defaults>
</compile_context>

<pallas_src>
import functools

import jax
import jax.numpy as jnp
import numpy as np
from jax import lax
from jax.experimental import pallas as pl
from jax.experimental.pallas import tpu as pltpu


# --------------------------------------------------------------------------
# Helpers
# --------------------------------------------------------------------------
def _round_up(x, m):
    return ((x + m - 1) // m) * m


def _choose_tile(dim, target):
    """Return (tile, padded_dim): full dim if small, else `target` tiles."""
    if dim <= target:
        return dim, dim
    return target, _round_up(dim, target)


def _pad2(a, shape):
    pads = tuple((0, t - s) for s, t in zip(a.shape, shape))
    if all(p[1] == 0 for p in pads):
        return a
    return jnp.pad(a, pads)


# --------------------------------------------------------------------------
# Kernel: out = relu(x @ W + b), optionally followed by row-wise L2 normalize
# --------------------------------------------------------------------------
def _linear_relu_kernel(x_ref, w_ref, b_ref, o_ref, acc_ref, *, normalize):
    k = pl.program_id(2)

    @pl.when(k == 0)
    def _():
        acc_ref[...] = jnp.zeros_like(acc_ref)

    acc_ref[...] += jnp.dot(x_ref[...], w_ref[...],
                            preferred_element_type=jnp.float32)

    @pl.when(k == pl.num_programs(2) - 1)
    def _():
        out = jnp.maximum(acc_ref[...] + b_ref[...].astype(jnp.float32), 0.0)
        if normalize:
            # torch F.normalize(dim=1, eps=1e-12):
            #   x / max(||x||, 1e-12) == x * rsqrt(max(||x||^2, 1e-24))
            ssq = jnp.sum(out * out, axis=-1, keepdims=True)
            out = out * lax.rsqrt(jnp.maximum(ssq, 1e-24))
        o_ref[...] = out.astype(o_ref.dtype)


# --------------------------------------------------------------------------
# Wrapper: tiled (batch, out, K) pallas_call
# --------------------------------------------------------------------------
@functools.partial(jax.jit,
                   static_argnames=("normalize", "tb", "tk", "tn", "out_dtype"))
def linear_relu(x, w, b, *, normalize=False, tb=512, tk=1024, tn=1024,
                out_dtype=jnp.float32):
    """x: [B, Din], w: [Din, Dout], b: [1, Dout].

    Returns relu(x @ w + b), L2-normalized per row if normalize=True.
    """
    B, Din = x.shape
    Din_w, Dout = w.shape
    assert Din == Din_w and b.shape == (1, Dout)

    TB, Bp = _choose_tile(B, tb)
    TK, Kp = _choose_tile(Din, tk)
    if normalize:
        # need the whole row resident to compute the L2 norm;
        # Dout == num_units (small) on this path.
        TN, Np = Dout, Dout
    else:
        TN, Np = _choose_tile(Dout, tn)

    # Alignment only matters when we actually tile (full-dim blocks are legal).
    if Bp > TB:
        assert TB % 8 == 0, "batch tile must be a multiple of 8"
    if Kp > TK:
        assert TK % 128 == 0, "K tile must be a multiple of 128"
    if Np > TN:
        assert TN % 128 == 0, "N tile must be a multiple of 128"

    # Zero padding is exact: padded K contributes 0 to the accumulator,
    # padded batch rows / output cols are sliced off below.
    xp = _pad2(x, (Bp, Kp))
    wp = _pad2(w, (Kp, Np))
    bp = _pad2(b, (1, Np))

    grid = (Bp // TB, Np // TN, Kp // TK)

    out = pl.pallas_call(
        functools.partial(_linear_relu_kernel, normalize=normalize),
        out_shape=jax.ShapeDtypeStruct((Bp, Np), out_dtype),
        grid_spec=pltpu.PrefetchScalarGridSpec(
            num_scalar_prefetch=0,
            grid=grid,
            in_specs=[
                pl.BlockSpec((TB, TK), lambda bi, ni, ki: (bi, ki)),
                pl.BlockSpec((TK, TN), lambda bi, ni, ki: (ki, ni)),
                pl.BlockSpec((1, TN), lambda bi, ni, ki: (0, ni)),
            ],
            out_specs=pl.BlockSpec((TB, TN), lambda bi, ni, ki: (bi, ni)),
            scratch_shapes=[pltpu.VMEM((TB, TN), jnp.float32)],
        ),
        compiler_params=pltpu.CompilerParams(
            dimension_semantics=("parallel", "parallel", "arbitrary"),
            vmem_limit_bytes=32 * 1024 * 1024,
        ),
    )(xp, wp, bp)

    if (Bp, Np) != (B, Dout):
        out = out[:B, :Dout]
    return out


def pretrain_forward(x, w_enc, b_enc, w_dec, b_dec, *, tb, tk, tn):
    """encoder -> L2-normalize (fused) -> decoder. Returns (x_recon, core_n)."""
    core_n = linear_relu(x, w_enc, b_enc, normalize=True, tb=tb, tk=tk, tn=tn)
    x_recon = linear_relu(core_n, w_dec, b_dec, normalize=False,
                          tb=tb, tk=tk, tn=tn)
    return x_recon, core_n


# --------------------------------------------------------------------------
# CLIP module (default hyperparameters, eval-mode forward)
# --------------------------------------------------------------------------
class CLIPPallas:
    def __init__(self, n_peaks, n_genes, num_units=32, seed=0,
                 tb=512, tk=1024, tn=1024):
        # num_layers=1, skip_rna=True, layer_norm=False (defaults).
        # PyTorch-style uniform(-1/sqrt(fan_in), 1/sqrt(fan_in)) init.
        self.tb, self.tk, self.tn = tb, tk, tn

        key = jax.random.PRNGKey(seed)
        ks = jax.random.split(key, 8)

        def init_linear(kw, kb, fan_in, fan_out):
            bound = 1.0 / np.sqrt(fan_in)
            # stored already transposed: [fan_in, fan_out]
            w = jax.random.uniform(kw, (fan_in, fan_out), jnp.float32,
                                   -bound, bound)
            b = jax.random.uniform(kb, (1, fan_out), jnp.float32,
                                   -bound, bound)
            return w, b

        # rna_to_core / core_to_rna
        self.w_rna_enc, self.b_rna_enc = init_linear(ks[0], ks[1], n_genes, num_units)
        self.w_rna_dec, self.b_rna_dec = init_linear(ks[2], ks[3], num_units, n_genes)
        # atac_to_core / core_to_atac
        self.w_atac_enc, self.b_atac_enc = init_linear(ks[4], ks[5], n_peaks, num_units)
        self.w_atac_dec, self.b_atac_dec = init_linear(ks[6], ks[7], num_units, n_peaks)

        # TODO(synk): dropout layers are identity in eval mode; no stochastic
        # dropout is implemented in-kernel.
        # TODO(synk): self.layer_norm=False by default, so the BatchNorm1d
        # branches are never taken and are not implemented.
        # TODO(synk): parameters kept in f32 to preserve 1e-5 test tolerance;
        # for the HBM-bound real shapes, casting x / weights to bf16 (keeping
        # the f32 accumulator) roughly halves wall-clock.

    def forward(self, x, modality="rna", task="align"):
        tb, tk, tn = self.tb, self.tk, self.tn
        if modality == "rna":
            if task == "align":
                core = linear_relu(x, self.w_rna_enc, self.b_rna_enc,
                                   tb=tb, tk=tk, tn=tn)
                return core, x
            elif task == "pretrain":
                x_recon, core = pretrain_forward(
                    x, self.w_rna_enc, self.b_rna_enc,
                    self.w_rna_dec, self.b_rna_dec, tb=tb, tk=tk, tn=tn)
                return x_recon, core
        elif modality == "atac":
            if task == "pretrain":
                x_recon, core = pretrain_forward(
                    x, self.w_atac_enc, self.b_atac_enc,
                    self.w_atac_dec, self.b_atac_dec, tb=tb, tk=tk, tn=tn)
                return x_recon, core
            elif task == "align":
                # skip_rna=True -> no atac_to_rna; genes is None
                core = linear_relu(x, self.w_atac_enc, self.b_atac_enc,
                                   tb=tb, tk=tk, tn=tn)
                return core, None
        raise ValueError(f"bad modality/task: {modality}/{task}")


# --------------------------------------------------------------------------
# Pure-JAX reference for verification
# --------------------------------------------------------------------------
def _ref_linear_relu(x, w, b):
    return jnp.maximum(
        jnp.dot(x, w, precision=lax.Precision.HIGHEST) + b, 0.0)


def _ref_pretrain(x, we, be, wd, bd):
    core = _ref_linear_relu(x, we, be)
    n = jnp.sqrt(jnp.sum(core * core, axis=-1, keepdims=True))
    core_n = core / jnp.maximum(n, 1e-12)
    recon = _ref_linear_relu(core_n, wd, bd)
    return recon, core_n


if __name__ == "__main__":
    # Small shapes, but chosen (with small tile targets) so the grid actually
    # has multiple batch / K / N tiles and exercises padding on every axis.
    batch, n_genes, n_peaks, num_units = 20, 200, 384, 32

    model = CLIPPallas(n_peaks=n_peaks, n_genes=n_genes, num_units=num_units,
                       seed=0, tb=8, tk=128, tn=128)

    key = jax.random.PRNGKey(0)
    k_rna, k_atac = jax.random.split(key)
    x_rna = jax.random.normal(k_rna, (batch, n_genes), jnp.float32)
    x_atac = jax.random.normal(k_atac, (batch, n_peaks), jnp.float32)

    # rna / align
    core_a, genes_a = model.forward(x_rna, modality="rna", task="align")
    # rna / pretrain
    recon_r, core_r = model.forward(x_rna, modality="rna", task="pretrain")
    # atac / pretrain
    recon_p, core_p = model.forward(x_atac, modality="atac", task="pretrain")
    # atac / align (skip_rna -> genes is None)
    core_aa, genes_aa = model.forward(x_atac, modality="atac", task="align")

    jax.block_until_ready((core_a, recon_r, core_r, recon_p, core_p, core_aa))

    # verify against pure-JAX reference
    ref_core_a = _ref_linear_relu(x_rna, model.w_rna_enc, model.b_rna_enc)
    ref_recon_r, ref_core_r = _ref_pretrain(
        x_rna, model.w_rna_enc, model.b_rna_enc,
        model.w_rna_dec, model.b_rna_dec)
    ref_recon_p, ref_core_p = _ref_pretrain(
        x_atac, model.w_atac_enc, model.b_atac_enc,
        model.w_atac_dec, model.b_atac_dec)
    ref_core_aa = _ref_linear_relu(x_atac, model.w_atac_enc, model.b_atac_enc)

    assert genes_aa is None
    np.testing.assert_allclose(np.asarray(core_a), np.asarray(ref_core_a),
                               rtol=1e-5, atol=1e-5)
    np.testing.assert_allclose(np.asarray(genes_a), np.asarray(x_rna),
                               rtol=0, atol=0)
    np.testing.assert_allclose(np.asarray(recon_r), np.asarray(ref_recon_r),
                               rtol=1e-5, atol=1e-5)
    np.testing.assert_allclose(np.asarray(core_r), np.asarray(ref_core_r),
                               rtol=1e-5, atol=1e-5)
    np.testing.assert_allclose(np.asarray(recon_p), np.asarray(ref_recon_p),
                               rtol=1e-5, atol=1e-5)
    np.testing.assert_allclose(np.asarray(core_p), np.asarray(ref_core_p),
                               rtol=1e-5, atol=1e-5)
    np.testing.assert_allclose(np.asarray(core_aa), np.asarray(ref_core_aa),
                               rtol=1e-5, atol=1e-5)

    print("KERNEL_OK")
</pallas_src>

<mosaic_0001>
module attributes {stable_mosaic.version = 11 : i64} {
  func.func @_linear_relu_kernel(%arg0: i32, %arg1: i32, %arg2: i32, %arg3: memref<8x128xf32, #tpu.memory_space<vmem>>, %arg4: memref<128x32xf32, #tpu.memory_space<vmem>>, %arg5: memref<1x32xf32, #tpu.memory_space<vmem>>, %arg6: memref<8x32xf32, #tpu.memory_space<vmem>>, %arg7: memref<8x32xf32, #tpu.memory_space<vmem>>) attributes {dimension_semantics = [#tpu.dimension_semantics<parallel>, #tpu.dimension_semantics<parallel>, #tpu.dimension_semantics<arbitrary>], iteration_bounds = array<i64: 3, 1, 2>, scalar_prefetch = 0 : i64, scratch_operands = 1 : i64, tpu.core_type = #tpu.core_type<tc>, window_params = [{transform_indices = @transform_0, window_bounds = array<i64: 8, 128>}, {transform_indices = @transform_1, window_bounds = array<i64: 128, 32>}, {transform_indices = @transform_2, window_bounds = array<i64: 1, 32>}, {transform_indices = @transform_3, window_bounds = array<i64: 8, 32>}]} {
    %c0_i32 = arith.constant 0 : i32
    %0 = arith.cmpi eq, %arg2, %c0_i32 : i32
    %1 = arith.extui %0 : i1 to i32
    %c0_i32_0 = arith.constant 0 : i32
    %2 = arith.cmpi ne, %1, %c0_i32_0 : i32
    scf.if %2 {
      %cst_9 = arith.constant 0.000000e+00 : f32
      %12 = vector.broadcast %cst_9 : f32 to vector<8x32xf32>
      %c0_10 = arith.constant 0 : index
      %c0_11 = arith.constant 0 : index
      %13 = vector.load %arg7[%c0_10, %c0_11] : memref<8x32xf32, #tpu.memory_space<vmem>>, vector<8x32xf32>
      tpu.vector_store %arg7[%c0_10, %c0_11], %12 {strides = array<i32>} : memref<8x32xf32, #tpu.memory_space<vmem>>, vector<8x32xf32>,
    } else {
    }
    %c0 = arith.constant 0 : index
    %c0_1 = arith.constant 0 : index
    %3 = vector.load %arg7[%c0, %c0_1] : memref<8x32xf32, #tpu.memory_space<vmem>>, vector<8x32xf32>
    %c0_2 = arith.constant 0 : index
    %c0_3 = arith.constant 0 : index
    %4 = vector.load %arg3[%c0_2, %c0_3] : memref<8x128xf32, #tpu.memory_space<vmem>>, vector<8x128xf32>
    %c0_4 = arith.constant 0 : index
    %c0_5 = arith.constant 0 : index
    %5 = vector.load %arg4[%c0_4, %c0_5] : memref<128x32xf32, #tpu.memory_space<vmem>>, vector<128x32xf32>
    %cst = arith.constant dense<0.000000e+00> : vector<8x32xf32>
    %6 = tpu.matmul %4, %5, %cst {dimension_numbers = #tpu.dot_dimension_numbers<[1], [0], [0], [1], [0, 0, 1, 1], [], []>} : vector<8x128xf32>, vector<128x32xf32>, vector<8x32xf32> -> vector<8x32xf32>
    %7 = arith.addf %3, %6 : vector<8x32xf32>
    %c0_6 = arith.constant 0 : index
    %c0_7 = arith.constant 0 : index
    %8 = vector.load %arg7[%c0_6, %c0_7] : memref<8x32xf32, #tpu.memory_space<vmem>>, vector<8x32xf32>
    tpu.vector_store %arg7[%c0_6, %c0_7], %7 {strides = array<i32>} : memref<8x32xf32, #tpu.memory_space<vmem>>, vector<8x32xf32>,
    %c1_i32 = arith.constant 1 : i32
    %9 = arith.cmpi eq, %arg2, %c1_i32 : i32
    %10 = arith.extui %9 : i1 to i32
    %c0_i32_8 = arith.constant 0 : i32
    %11 = arith.cmpi ne, %10, %c0_i32_8 : i32
    scf.if %11 {
      %c0_9 = arith.constant 0 : index
      %c0_10 = arith.constant 0 : index
      %12 = vector.load %arg7[%c0_9, %c0_10] : memref<8x32xf32, #tpu.memory_space<vmem>>, vector<8x32xf32>
      %c0_11 = arith.constant 0 : index
      %c0_12 = arith.constant 0 : index
      %13 = vector.load %arg5[%c0_11, %c0_12] : memref<1x32xf32, #tpu.memory_space<vmem>>, vector<1x32xf32>
      %14 = vector.broadcast %13 : vector<1x32xf32> to vector<8x32xf32>
      %15 = arith.addf %12, %14 : vector<8x32xf32>
      %cst_13 = arith.constant 0.000000e+00 : f32
      %16 = vector.broadcast %cst_13 : f32 to vector<8x32xf32>
      %17 = arith.maximumf %15, %16 : vector<8x32xf32>
      %c0_14 = arith.constant 0 : index
      %c0_15 = arith.constant 0 : index
      %18 = vector.load %arg6[%c0_14, %c0_15] : memref<8x32xf32, #tpu.memory_space<vmem>>, vector<8x32xf32>
      tpu.vector_store %arg6[%c0_14, %c0_15], %17 {strides = array<i32>} : memref<8x32xf32, #tpu.memory_space<vmem>>, vector<8x32xf32>,
    } else {
    }
    return
  }
  func.func @transform_0(%arg0: i32, %arg1: i32, %arg2: i32) -> (i32, i32) {
    %c0_i32 = arith.constant 0 : i32
    return %arg0, %arg2 : i32, i32
  }
  func.func @transform_1(%arg0: i32, %arg1: i32, %arg2: i32) -> (i32, i32) {
    %c0_i32 = arith.constant 0 : i32
    return %arg2, %arg1 : i32, i32
  }
  func.func @transform_2(%arg0: i32, %arg1: i32, %arg2: i32) -> (i32, i32) {
    %c0_i32 = arith.constant 0 : i32
    %c0_i32_0 = arith.constant 0 : i32
    return %c0_i32, %arg1 : i32, i32
  }
  func.func @transform_3(%arg0: i32, %arg1: i32, %arg2: i32) -> (i32, i32) {
    %c0_i32 = arith.constant 0 : i32
    return %arg0, %arg1 : i32, i32
  }
}

</mosaic_0001>

<llo_original>
// kernel: linear_relu.1
$region0: #{linear_relu.1}
  #allocation0 [shape = 'u32[]', space=smem, size = 0x4, offset = 0x4, fixed_abs, tag = 'smem constant byte address 0x4 - core index']
  #allocation1 [shape = 'u32[72,128]{1,0:T(1,128)}', space=vmem, size = 0x9000, scoped, tag = 'internal scratch']
  #allocation2 [shape = 'f32[8,32]{1,0:T(8,128)}', space=vmem, size = 0x1000, scoped, tag = 'scratch operand']
  %s0 = inlined_call_operand.vmem [shape: f32[24,256], index: 0, kind: input, shape index: {}]
  %s1 = inlined_call_operand.vmem [shape: f32[256,32], index: 1, kind: input, shape index: {}]
  %s2 = inlined_call_operand.vmem [shape: f32[1,32], index: 2, kind: input, shape index: {}]
  %s3 = inlined_call_operand.hbm [shape: f32[24,32], index: 3, kind: output, shape index: {}]
  %s4 = sld [smem:[#allocation0]]
  $region53: #{linear_relu.1} parent=0
    _
  %s6 = ssub.s32 1, %s4
  %s7 = scalar_select 0, %s6, %s4
  $region1: #{linear_relu.1} parent=0
    #allocation3 [shape = 'u8[8192]{0}', space=vmem, size = 0x2000, scoped, tag = 'output window, operand 0']
    #allocation4 [shape = 's32[2]{0}', space=sflag, size = 0x8, scoped, tag = 'scoped memory for linear_relu.1']
    %8 = vsyncpa [#allocation4], 0
    %s9 = scalar_lea.sflag [#allocation4], 1
    %10 = vsyncpa %s9, 0
    loop: start=0, step=1, limit=8
    $region2: #{linear_relu.1} parent=1 // loop_pre_header
      _
    $region3: #{linear_relu.1} parent=1 // loop_header
      %s12 = sphi 0, %s16
      %p13 = scmp.ge.s32.totalorder %s12, 8
      %s19 = sphi 0, %s38
      %s20 = sphi 0, %s34
      %s21 = sphi 0, %s30
      %s22 = sphi 0, %s19
      %s23 = sphi 0, %s20
      %s24 = sphi 0, %s21
      %s25 = sphi 0, %s22
      %s26 = sphi 0, %s23
      %s27 = sphi 0, %s24
      %s43 = sphi 0, %s45
      %s46 = sphi 0, %s43
      %s47 = sphi 0, %s46
      %s63 = sphi 0, %s47
      %s71 = sphi 0, %s73
      %s74 = sphi 0, %s71
      %s75 = sphi 0, %s74
      %s91 = sphi 0, %s75
      %s97 = sphi 0, %s99
      %s100 = sphi 0, %s97
      %s101 = sphi 0, %s100
      %s117 = sphi 0, %s101
      %s125 = sphi 0, %s127
      %s128 = sphi 0, %s125
      %s129 = sphi 0, %s128
      %s145 = sphi 0, %s129
    $region4: #{linear_relu.1} parent=1 // loop_header_branch
      %15 = sbr.rel (%p13) target = $region8
    $region5: #{linear_relu.1} parent=1 // loop_body
      %s17 = ssub.s32 %s12, 1
      %s18 = ssub.s32 %s12, 2
      %s28 = sadd.s32 1, %s21
      %p29 = scmp.ge.s32.totalorder %s28, 2
      %s30 = scalar_select %p29, 0, %s28
      %s31 = sadd.s32 1, %s20
      %s32 = scalar_select %p29, %s31, %s20
      %p33 = scmp.ge.s32.totalorder %s32, 1
      %s34 = scalar_select %p33, 0, %s32
      %s35 = sadd.s32 1, %s19
      %s36 = scalar_select %p33, %s35, %s19
      %p37 = scmp.ge.s32.totalorder %s36, 3
      %s38 = scalar_select %p37, 0, %s36
      %s39 = ssub.s32 %s19, %s38
      %s40 = ssub.s32 %s21, %s30
      %s41 = sor.u32 %s39, %s40
      %p42 = scmp.eq.s32.totalorder %s41, 0
      %s44 = sadd.s32 %s43, 1
      %s45 = scalar_select %p42, %s43, %s44
      %p48 = pneg %p42
      %p49 = scmp.eq.s32.totalorder %s12, 5
      %p50 = por %p48, %p49
      %p51 = scmp.ne.s32.totalorder %s43, %s46
      %p52 = scmp.eq.s32.totalorder %s12, 0
      %p53 = por %p51, %p52
      %p54 = scmp.ne.s32.totalorder %s43, %s46
      %p55 = scmp.eq.s32.totalorder %s17, 5
      %p56 = por %p54, %p55
      %p57 = scmp.ne.s32.totalorder %s46, %s47
      %p58 = scmp.eq.s32.totalorder %s17, 0
      %p59 = por %p57, %p58
      %p60 = scmp.ne.s32.totalorder %s46, %s47
      %p61 = scmp.eq.s32.totalorder %s18, 5
      %p62 = por %p60, %p61
      %p64 = scmp.ne.s32.totalorder %s47, %s63
      %p65 = scmp.eq.s32.totalorder %s18, 0
      %p66 = por %p64, %p65
      %s67 = ssub.s32 %s21, %s30
      %s68 = ssub.s32 %s20, %s34
      %s69 = sor.u32 %s67, %s68
      %p70 = scmp.eq.s32.totalorder %s69, 0
      %s72 = sadd.s32 %s71, 1
      %s73 = scalar_select %p70, %s71, %s72
      %p76 = pneg %p70
      %p77 = scmp.eq.s32.totalorder %s12, 5
      %p78 = por %p76, %p77
      %p79 = scmp.ne.s32.totalorder %s71, %s74
      %p80 = scmp.eq.s32.totalorder %s12, 0
      %p81 = por %p79, %p80
      %p82 = scmp.ne.s32.totalorder %s71, %s74
      %p83 = scmp.eq.s32.totalorder %s17, 5
      %p84 = por %p82, %p83
      %p85 = scmp.ne.s32.totalorder %s74, %s75
      %p86 = scmp.eq.s32.totalorder %s17, 0
      %p87 = por %p85, %p86
      %p88 = scmp.ne.s32.totalorder %s74, %s75
      %p89 = scmp.eq.s32.totalorder %s18, 5
      %p90 = por %p88, %p89
      %p92 = scmp.ne.s32.totalorder %s75, %s91
      %p93 = scmp.eq.s32.totalorder %s18, 0
      %p94 = por %p92, %p93
      %s95 = ssub.s32 %s20, %s34
      %p96 = scmp.eq.s32.totalorder %s95, 0
      %s98 = sadd.s32 %s97, 1
      %s99 = scalar_select %p96, %s97, %s98
      %p102 = pneg %p96
      %p103 = scmp.eq.s32.totalorder %s12, 5
      %p104 = por %p102, %p103
      %p105 = scmp.ne.s32.totalorder %s97, %s100
      %p106 = scmp.eq.s32.totalorder %s12, 0
      %p107 = por %p105, %p106
      %p108 = scmp.ne.s32.totalorder %s97, %s100
      %p109 = scmp.eq.s32.totalorder %s17, 5
      %p110 = por %p108, %p109
      %p111 = scmp.ne.s32.totalorder %s100, %s101
      %p112 = scmp.eq.s32.totalorder %s17, 0
      %p113 = por %p111, %p112
      %p114 = scmp.ne.s32.totalorder %s100, %s101
      %p115 = scmp.eq.s32.totalorder %s18, 5
      %p116 = por %p114, %p115
      %p118 = scmp.ne.s32.totalorder %s101, %s117
      %p119 = scmp.eq.s32.totalorder %s18, 0
      %p120 = por %p118, %p119
      %s121 = ssub.s32 %s19, %s38
      %s122 = ssub.s32 %s20, %s34
      %s123 = sor.u32 %s121, %s122
      %p124 = scmp.eq.s32.totalorder %s123, 0
      %s126 = sadd.s32 %s125, 1
      %s127 = scalar_select %p124, %s125, %s126
      %p130 = pneg %p124
      %p131 = scmp.eq.s32.totalorder %s12, 5
      %p132 = por %p130, %p131
      %p133 = scmp.ne.s32.totalorder %s125, %s128
      %p134 = scmp.eq.s32.totalorder %s12, 0
      %p135 = por %p133, %p134
      %p136 = scmp.ne.s32.totalorder %s125, %s128
      %p137 = scmp.eq.s32.totalorder %s17, 5
      %p138 = por %p136, %p137
      %p139 = scmp.ne.s32.totalorder %s128, %s129
      %p140 = scmp.eq.s32.totalorder %s17, 0
      %p141 = por %p139, %p140
      %p142 = scmp.ne.s32.totalorder %s128, %s129
      %p143 = scmp.eq.s32.totalorder %s18, 5
      %p144 = por %p142, %p143
      %p146 = scmp.ne.s32.totalorder %s129, %s145
      %p147 = scmp.eq.s32.totalorder %s18, 0
      %p148 = por %p146, %p147
      %p149 = scmp.le.s32.totalorder 1, %s12
      %p150 = scmp.lt.s32.totalorder %s12, 7
      %p151 = pnand %p149, %p150
      %p152 = pneg %p151
      // Predicated region
      $region9: #{linear_relu.1} parent=5 // pred_check
        _
      $region10: #{linear_relu.1} parent=5 // pred_check_branch
        %154 = sbr.rel (%p151) target = $region12
      $region11: #{linear_relu.1} parent=5 // pred_region
        %s155 = ssub.s32 %s12, 1
        // Predicated region
        $region13: #{linear_relu.1} parent=11 // pred_check
          %p156 = pneg %p113
        $region14: #{linear_relu.1} parent=11 // pred_check_branch
          %158 = sbr.rel (%p156) target = $region16
        $region15: #{linear_relu.1} parent=11 // pred_region
          %p159 = scmp.lt.s32.totalorder %s23, 0
          %s160 = scalar_select %p159, %s23, 0
          %s161 = scalar_lea.vmem %s2, %s160
        $region16: #{linear_relu.1} parent=11 // pred_fallthru
          _
      $region12: #{linear_relu.1} parent=5 // pred_fallthru
        _
      %p162 = scmp.lt.s32.totalorder %s12, 6
      // Predicated region
      $region17: #{linear_relu.1} parent=5 // pred_check
        %p163 = pneg %p162
      $region18: #{linear_relu.1} parent=5 // pred_check_branch
        %165 = sbr.rel (%p163) target = $region20
      $region19: #{linear_relu.1} parent=5 // pred_region
        // Predicated region
        $region21: #{linear_relu.1} parent=19 // pred_check
          %p166 = pneg %p53
        $region22: #{linear_relu.1} parent=19 // pred_check_branch
          %168 = sbr.rel (%p166) target = $region24
        $region23: #{linear_relu.1} parent=19 // pred_region
          %p169 = scmp.lt.s32.totalorder %s19, 2
          %s170 = scalar_select %p169, %s19, 2
          %p171 = scmp.lt.s32.totalorder %s21, 1
          %s172 = scalar_select %p171, %s21, 1
          %s173 = smul.addr %s170, 2
          %s174 = sadd.s32 %s172, %s173
          %s175 = smul.addr %s174, 8
          %s176 = scalar_lea.vmem %s0, %s175
        $region24: #{linear_relu.1} parent=19 // pred_fallthru
          _
        // Predicated region
        $region25: #{linear_relu.1} parent=19 // pred_check
          %p177 = pneg %p81
        $region26: #{linear_relu.1} parent=19 // pred_check_branch
          %179 = sbr.rel (%p177) target = $region28
        $region27: #{linear_relu.1} parent=19 // pred_region
          %s180 = smul.u32 16, %s21
          %p181 = scmp.lt.s32.totalorder %s180, 31
          %s182 = scalar_select %p181, %s180, 31
          %p183 = scmp.lt.s32.totalorder %s20, 0
          %s184 = scalar_select %p183, %s20, 0
          %s185 = sadd.s32 %s184, %s182
          %s186 = smul.addr %s185, 8
          %s187 = scalar_lea.vmem %s1, %s186
          %s188 = smul.u32 16, %s21
        $region28: #{linear_relu.1} parent=19 // pred_fallthru
          _
      $region20: #{linear_relu.1} parent=5 // pred_fallthru
        _
      %p189 = scmp.le.s32.totalorder 1, %s12
      %p190 = scmp.lt.s32.totalorder %s12, 7
      %p191 = pnand %p189, %p190
      %p192 = pneg %p191
      // Predicated region
      $region29: #{linear_relu.1} parent=5 // pred_check
        _
      $region30: #{linear_relu.1} parent=5 // pred_check_branch
        %194 = sbr.rel (%p191) target = $region32
      $region31: #{linear_relu.1} parent=5 // pred_region
        %s195 = ssub.s32 %s12, 1
        %p196 = scmp.lt.s32.totalorder %s22, 2
        %s197 = scalar_select %p196, %s22, 2
        %p198 = scmp.lt.s32.totalorder %s24, 1
        %s199 = scalar_select %p198, %s24, 1
        %s200 = smul.addr %s197, 2
        %s201 = sadd.s32 %s199, %s200
        %s202 = smul.addr %s201, 8
        %s203 = scalar_lea.vmem %s0, %s202
        %p204 = pneg %p59
        %p205 = pneg %p56
        %s206 = smul.u32 16, %s24
        %p207 = scmp.lt.s32.totalorder %s206, 31
        %s208 = scalar_select %p207, %s206, 31
        %p209 = scmp.lt.s32.totalorder %s23, 0
        %s210 = scalar_select %p209, %s23, 0
        %s211 = sadd.s32 %s210, %s208
        %s212 = smul.addr %s211, 8
        %s213 = scalar_lea.vmem %s1, %s212
        %p214 = pneg %p87
        %p215 = pneg %p84
        %p216 = scmp.lt.s32.totalorder %s23, 0
        %s217 = scalar_select %p216, %s23, 0
        %s218 = scalar_lea.vmem %s2, %s217
        %p219 = pneg %p113
        %p220 = pneg %p110
        %p221 = pneg %p141
        %p222 = pneg %p138
        %s223 = sand.u32 %s128, 1
        %s224 = scalar_lea.sflag [#allocation4], %s223
        %s225 = sand.u32 %s128, 1
        %s226 = smul.addr %s225, 8
        %s227 = scalar_lea.vmem [#allocation3], %s226
        %p228 = scmp.lt.s32.totalorder %s22, 2
        %s229 = scalar_select %p228, %s22, 2
        %p230 = scmp.lt.s32.totalorder %s24, 1
        %s231 = scalar_select %p230, %s24, 1
        %s232 = smul.addr %s229, 2
        %s233 = sadd.s32 %s231, %s232
        %s234 = smul.addr %s233, 8
        %s235 = scalar_lea.vmem %s0, %s234
        %s236 = smul.u32 16, %s24
        %p237 = scmp.lt.s32.totalorder %s236, 31
        %s238 = scalar_select %p237, %s236, 31
        %p239 = scmp.lt.s32.totalorder %s23, 0
        %s240 = scalar_select %p239, %s23, 0
        %s241 = sadd.s32 %s240, %s238
        %s242 = smul.addr %s241, 8
        %s243 = scalar_lea.vmem %s1, %s242
        %s244 = smul.u32 16, %s24
        %p245 = scmp.lt.s32.totalorder %s23, 0
        %s246 = scalar_select %p245, %s23, 0
        %s247 = scalar_lea.vmem %s2, %s246
        %p248 = scmp.eq.s32.totalorder %s24, 0
        // Predicated region
        $region33: #{linear_relu.1} parent=31 // pred_check
          %p249 = pneg %p248
        $region34: #{linear_relu.1} parent=31 // pred_check_branch
          %251 = sbr.rel (%p249) target = $region36
        $region35: #{linear_relu.1} parent=31 // pred_region
          %vm252 = vcmask 261120
          %253 = vst.msk [vmem:[#allocation2] sm:$0xff] %vm252, 0.0
        $region36: #{linear_relu.1} parent=31 // pred_fallthru
          _
        %v254 = vld [vmem:[#allocation2] sm:$0xff]
        %v255 = vld [vmem:[%s235] sm:$0xff]
        %v256 = vld [vmem:[%s243] sm:$0xff]
        %v257 = vld [vmem:[%s243 + $0x8] sm:$0xff]
        %v258 = vld [vmem:[%s243 + $0x10] sm:$0xff]
        %v259 = vld [vmem:[%s243 + $0x18] sm:$0xff]
        %v260 = vld [vmem:[%s243 + $0x20] sm:$0xff]
        %v261 = vld [vmem:[%s243 + $0x28] sm:$0xff]
        %v262 = vld [vmem:[%s243 + $0x30] sm:$0xff]
        %v263 = vld [vmem:[%s243 + $0x38] sm:$0xff]
        %v264 = vld [vmem:[%s243 + $0x40] sm:$0xff]
        %v265 = vld [vmem:[%s243 + $0x48] sm:$0xff]
        %v266 = vld [vmem:[%s243 + $0x50] sm:$0xff]
        %v267 = vld [vmem:[%s243 + $0x58] sm:$0xff]
        %v268 = vld [vmem:[%s243 + $0x60] sm:$0xff]
        %v269 = vld [vmem:[%s243 + $0x68] sm:$0xff]
        %v270 = vld [vmem:[%s243 + $0x70] sm:$0xff]
        %v271 = vld [vmem:[%s243 + $0x78] sm:$0xff]
        %272 = vmatpush.msra.mxu0 %v271
        %273 = vmatpush.msra.mxu0 %v270
        %274 = vmatpush.msra.mxu0 %v269
        %275 = vmatpush.msra.mxu0 %v268
        %276 = vmatpush.msra.mxu0 %v267
        %277 = vmatpush.msra.mxu0 %v266
        %278 = vmatpush.msra.mxu0 %v265
        %279 = vmatpush.msra.mxu0 %v264
        %280 = vmatpush.msra.mxu0 %v263
        %281 = vmatpush.msra.mxu0 %v262
        %282 = vmatpush.msra.mxu0 %v261
        %283 = vmatpush.msra.mxu0 %v260
        %284 = vmatpush.msra.mxu0 %v259
        %285 = vmatpush.msra.mxu0 %v258
        %286 = vmatpush.msra.mxu0 %v257
        %287 = vmatpush.msra.mxu0 %v256
        %288 = vmatmul.f32.gmra.mxu0 %v255
        %v289 = vpop.f32.mrf.mxu0
        %v290 = vadd.f32 0.0, %v289
        %291 = vdwg.mxu0
        %v292 = vadd.f32 %v254, %v290
        %vm293 = vcmask 261120
        %294 = vst.msk [vmem:[#allocation2] sm:$0xff] %vm293, %v292
        %p295 = scmp.eq.s32.totalorder %s24, 1
        // Predicated region
        $region37: #{linear_relu.1} parent=31 // pred_check
          %p296 = pneg %p295
        $region38: #{linear_relu.1} parent=31 // pred_check_branch
          %298 = sbr.rel (%p296) target = $region40
        $region39: #{linear_relu.1} parent=31 // pred_region
          %v299 = vld [vmem:[#allocation2] sm:$0xff]
          %v300 = vld [vmem:[%s247] sm:$0x1]
          %v302 = vperm.slane %v300, 0
          %v304 = vadd.f32 %v299, %v302
          %v305 = vmax.f32 %v304, 0.0
          %306 = vst.msk [vmem:[%s227] sm:$0xff] %vm293, %v305
        $region40: #{linear_relu.1} parent=31 // pred_fallthru
          _
        %s307 = sand.u32 %s128, 1
        %s308 = scalar_lea.sflag [#allocation4], %s307
        %s309 = sand.u32 %s128, 1
        %s310 = smul.addr %s309, 8
        %s311 = scalar_lea.vmem [#allocation3], %s310
        // Predicated region
        $region41: #{linear_relu.1} parent=31 // pred_check
          %p312 = pneg %p138
        $region42: #{linear_relu.1} parent=31 // pred_check_branch
          %314 = sbr.rel (%p312) target = $region44
        $region43: #{linear_relu.1} parent=31 // pred_region
          %316 = vsyncadd %s308, 0
          %s317 = sadd.s32 %s23, %s22
          %s318 = smul.addr %s317, 8
          %s319 = scalar_lea.hbm %s3, %s318
          %s321 = sshll.u32 %s311, 4
          %s322 = int_to_ptr.vmem [resolvable:$true] %s321
          %s323 = sshll.u32 %s319, 4
          %s324 = int_to_ptr.hbm [resolvable:$true] %s323
          %326 = dma.vmem_to_hbm [thread:$0]  %s322, 128, %s324, %s308
        $region44: #{linear_relu.1} parent=31 // pred_fallthru
          _
      $region32: #{linear_relu.1} parent=5 // pred_fallthru
        _
      %p327 = scmp.le.s32.totalorder 2, %s12
      // Predicated region
      $region45: #{linear_relu.1} parent=5 // pred_check
        %p328 = pneg %p327
      $region46: #{linear_relu.1} parent=5 // pred_check_branch
        %330 = sbr.rel (%p328) target = $region48
      $region47: #{linear_relu.1} parent=5 // pred_region
        %s331 = ssub.s32 %s12, 2
        // Predicated region
        $region49: #{linear_relu.1} parent=47 // pred_check
          %p332 = pneg %p144
        $region50: #{linear_relu.1} parent=47 // pred_check_branch
          %334 = sbr.rel (%p332) target = $region52
        $region51: #{linear_relu.1} parent=47 // pred_region
          %s335 = sand.u32 %s129, 1
          %s336 = scalar_lea.sflag [#allocation4], %s335
          %s337 = sand.u32 %s129, 1
          %s338 = smul.addr %s337, 8
          %s339 = scalar_lea.vmem [#allocation3], %s338
          %341 = dma.done %s336, 128
        $region52: #{linear_relu.1} parent=47 // pred_fallthru
          _
      $region48: #{linear_relu.1} parent=5 // pred_fallthru
        _
    $region6: #{linear_relu.1} parent=1 // loop_footer
      %s16 = sadd.s32 1, %s12
    $region7: #{linear_relu.1} parent=1 // loop_footer_branch
      %11 = sbr.rel target = $region3
    $region8: #{linear_relu.1} parent=1 // loop_exit
      _
    %342 = vsyncpa [#allocation4], 1
    %s343 = scalar_lea.sflag [#allocation4], 1
    %344 = vsyncpa %s343, 1

</llo_original>
